<compile_context>
chip_gen: v7x
topology: tpu7x:2x2x1
jax: 0.10.0
libtpu: 0.0.40
codegen_flags: <defaults>
</compile_context>

<pallas_src>
import functools

import jax
import jax.numpy as jnp
from jax import lax
from jax.experimental import pallas as pl
from jax.experimental.pallas import tpu as pltpu

C_OUT = 16       # conv output channels (num_out_kernel)
HID = 8          # hidden Linear out features
NCLS = 2         # output classes
KH = 3           # conv kernel height (taps over the sequence axis)
CP = 128         # lane-padded channel width for the whole output path
NEG = -1.0e30    # finite "-inf" so padded logit lanes drop out of log-softmax


# ---------------------------------------------------------------------------
# Pallas kernel: fused gather+conv as ONE matmul + ReLU + pool + MLP + LSM
# ---------------------------------------------------------------------------
def conv_model_kernel(sent_ref, fused_ref, bconv_ref, wh_ref, bh_ref,
                      wo_ref, bo_ref, rs_ref, soft_ref, *, seq_len):
    M = sent_ref.shape[0]                      # tokens in this block = TB * L
    L = seq_len
    TB = M // L
    Vp = fused_ref.shape[0]                    # vocab padded to 128 multiple
    T = L - (KH - 1)                           # valid conv output length

    # --- fused embedding gather + conv taps: one bf16 MXU matmul
    #     onehot (M, Vp) @ fused (Vp, KH*CP) -> y (M, KH*CP), f32 accumulation.
    #     ids >= vocab (incl. padded vocab rows) select a zero embedding.
    ids = sent_ref[...]                                       # (M, 1) int32
    iota_v = lax.broadcasted_iota(jnp.int32, (M, Vp), 1)
    onehot = (ids == iota_v).astype(fused_ref.dtype)          # exact in bf16
    y = jnp.dot(onehot, fused_ref[...],
                preferred_element_type=jnp.float32)           # (M, KH*CP)
    y = y.reshape(TB, L, KH * CP)              # lane-aligned leading-dim split

    # --- combine the KH=3 taps: acc[t] = y0[t] + y1[t+1] + y2[t+2].
    #     Sublane rolls run on the XLU slot (slack under the MXU work);
    #     wrapped positions t >= T are masked out before the pool.
    acc = y[:, :, 0:CP]
    acc = acc + pltpu.roll(y[:, :, CP:2 * CP], shift=L - 1, axis=1)
    acc = acc + pltpu.roll(y[:, :, 2 * CP:3 * CP], shift=L - 2, axis=1)
    acc = jnp.maximum(acc + bconv_ref[...][None], 0.0)        # bias + ReLU

    valid = lax.broadcasted_iota(jnp.int32, (1, L, 1), 1) < T
    acc = jnp.where(valid, acc, 0.0)

    # --- global average pool over the sequence -> rs (lane-dense store)
    rs = jnp.sum(acc, axis=1) * (1.0 / T)                     # (TB, CP)
    rs_ref[...] = rs.astype(rs_ref.dtype)

    # --- MLP head (f32): Linear(16->8)+ReLU, Linear(8->2), LogSoftmax
    hs = jnp.maximum(
        jnp.dot(rs, wh_ref[...], preferred_element_type=jnp.float32)
        + bh_ref[...], 0.0)                                   # (TB, CP)
    logits = (jnp.dot(hs, wo_ref[...], preferred_element_type=jnp.float32)
              + bo_ref[...])                                  # padded lanes ~ NEG
    m = jnp.max(logits, axis=-1, keepdims=True)
    z = logits - m
    lse = jnp.log(jnp.sum(jnp.exp(z), axis=-1, keepdims=True))
    soft_ref[...] = (z - lse).astype(soft_ref.dtype)


# ---------------------------------------------------------------------------
# Wrapper: fold table into conv weights, lane/vocab-pad, one grid step / batch
# ---------------------------------------------------------------------------
def _build_fused_params(params, compute_dtype):
    table = params["emb_table"].astype(jnp.float32)            # (V, E)
    V, E = table.shape
    v_pad = pl.cdiv(V, 128) * 128

    wconv = params["wconv"].astype(jnp.float32)                # (KH, E, C_OUT)
    wcat = jnp.zeros((E, KH * CP), jnp.float32)
    for k in range(KH):
        wcat = wcat.at[:, k * CP:k * CP + C_OUT].set(wconv[k])

    table_p = jnp.zeros((v_pad, E), jnp.float32).at[:V].set(table)
    # fused[v, k*CP + c] = emb_table[v] . wconv[k, :, c]   (done once by XLA)
    fused = (table_p @ wcat).astype(compute_dtype)             # (Vpad, KH*CP)

    bconv_p = jnp.zeros((1, CP), jnp.float32).at[:, :C_OUT].set(params["bconv"])
    wh_p = jnp.zeros((CP, CP), jnp.float32).at[:C_OUT, :HID].set(params["wh"])
    bh_p = jnp.zeros((1, CP), jnp.float32).at[:, :HID].set(params["bh"])
    wo_p = jnp.zeros((CP, CP), jnp.float32).at[:HID, :NCLS].set(params["wo"])
    # Padded logit lanes get a huge negative bias so they vanish in softmax.
    bo_p = jnp.full((1, CP), NEG, jnp.float32).at[:, :NCLS].set(params["bo"])
    return fused, bconv_p, wh_p, bh_p, wo_p, bo_p


def conv_model_forward(sentences, masks, params, *, tb=None,
                       compute_dtype=jnp.bfloat16):
    """Mirrors ConvModel.forward(sentences, masks) -> (rs, log_softmax)."""
    del masks  # accepted but unused by the reference forward pass
    B, L = sentences.shape
    assert L >= KH, "sequence length must be >= conv kernel height"

    fused, bconv_p, wh_p, bh_p, wo_p, bo_p = _build_fused_params(
        params, compute_dtype)

    # Whole batch in one grid step by default (M = B*L fills the MXU rows and
    # avoids per-step pipeline overhead on single-TC v5e/v6e).
    tb = B if tb is None else min(tb, B)
    b_pad = pl.cdiv(B, tb) * tb
    sent = sentences.astype(jnp.int32)
    if b_pad != B:
        sent = jnp.pad(sent, ((0, b_pad - B), (0, 0)))
    ids = sent.reshape(b_pad * L, 1)           # one token id per sublane row
    grid = (b_pad // tb,)

    def full(a):
        return pl.BlockSpec(a.shape, lambda i, nd=a.ndim: (0,) * nd)

    kernel = functools.partial(conv_model_kernel, seq_len=L)

    rs_pad, soft_pad = pl.pallas_call(
        kernel,
        out_shape=(jax.ShapeDtypeStruct((b_pad, CP), jnp.float32),
                   jax.ShapeDtypeStruct((b_pad, CP), jnp.float32)),
        grid=grid,
        in_specs=[pl.BlockSpec((tb * L, 1), lambda i: (i, 0)),   # token ids
                  full(fused), full(bconv_p),
                  full(wh_p), full(bh_p), full(wo_p), full(bo_p)],
        out_specs=(pl.BlockSpec((tb, CP), lambda i: (i, 0)),
                   pl.BlockSpec((tb, CP), lambda i: (i, 0))),
        compiler_params=pltpu.CompilerParams(
            dimension_semantics=("parallel",),
            vmem_limit_bytes=32 * 1024 * 1024),
    )(ids, fused, bconv_p, wh_p, bh_p, wo_p, bo_p)

    return rs_pad[:B, :C_OUT], soft_pad[:B, :NCLS]


# ---------------------------------------------------------------------------
# Pure-JAX reference for correctness checking
# ---------------------------------------------------------------------------
def reference_forward(sentences, params):
    emb = params["emb_table"][sentences]               # (B, L, E)
    wconv, bconv = params["wconv"], params["bconv"]
    B, L, E = emb.shape
    T = L - (KH - 1)
    acc = jnp.zeros((B, T, C_OUT), jnp.float32)
    for k in range(KH):
        acc = acc + jnp.einsum("ble,ec->blc", emb[:, k:k + T, :], wconv[k])
    acc = jax.nn.relu(acc + bconv[None])
    rs = jnp.mean(acc, axis=1)
    hs = jax.nn.relu(rs @ params["wh"] + params["bh"])
    logits = hs @ params["wo"] + params["bo"]
    return rs, jax.nn.log_softmax(logits, axis=-1)


# ---------------------------------------------------------------------------
if __name__ == "__main__":
    VOCAB, PAD = 50, 0
    EMB_DIM = 32          # emb_dim
    B, L = 16, 8          # batch, sequence length -> grid=(1,), M = 128

    key = jax.random.PRNGKey(0)
    k_emb, k_wc, k_bc, k_wh, k_bh, k_wo, k_bo, k_sent = jax.random.split(key, 8)

    emb_table = jax.random.normal(k_emb, (VOCAB, EMB_DIM), jnp.float32) * 0.1
    emb_table = emb_table.at[PAD].set(0.0)             # padding_idx row = 0

    params = {
        "emb_table": emb_table,
        # wconv[k, e, c] == W_pt[c, 0, k, e]
        "wconv": jax.random.normal(k_wc, (KH, EMB_DIM, C_OUT), jnp.float32) * 0.1,
        "bconv": jax.random.normal(k_bc, (1, C_OUT), jnp.float32) * 0.1,
        "wh":    jax.random.normal(k_wh, (C_OUT, HID), jnp.float32) * 0.1,
        "bh":    jax.random.normal(k_bh, (1, HID), jnp.float32) * 0.1,
        "wo":    jax.random.normal(k_wo, (HID, NCLS), jnp.float32) * 0.1,
        "bo":    jax.random.normal(k_bo, (1, NCLS), jnp.float32) * 0.1,
    }

    sentences = jax.random.randint(k_sent, (B, L), 0, VOCAB, dtype=jnp.int32)
    masks = jnp.ones((B, L), jnp.float32)              # unused by forward

    rs, soft = conv_model_forward(sentences, masks, params)
    jax.block_until_ready((rs, soft))

    rs_ref, soft_ref = reference_forward(sentences, params)
    assert rs.shape == (B, C_OUT) and soft.shape == (B, NCLS)
    # bf16 table/one-hot operands (f32 accumulation) -> loosened tolerances.
    assert jnp.allclose(rs, rs_ref, atol=1e-2, rtol=1e-2)
    assert jnp.allclose(soft, soft_ref, atol=1e-2, rtol=1e-2)

    print("KERNEL_OK")
</pallas_src>

<mosaic_0001>
module attributes {stable_mosaic.version = 11 : i64} {
  func.func @conv_model_kernel(%arg0: i32, %arg1: memref<128x1xi32, #tpu.memory_space<vmem>>, %arg2: memref<128x384xbf16, #tpu.memory_space<vmem>>, %arg3: memref<1x128xf32, #tpu.memory_space<vmem>>, %arg4: memref<128x128xf32, #tpu.memory_space<vmem>>, %arg5: memref<1x128xf32, #tpu.memory_space<vmem>>, %arg6: memref<128x128xf32, #tpu.memory_space<vmem>>, %arg7: memref<1x128xf32, #tpu.memory_space<vmem>>, %arg8: memref<16x128xf32, #tpu.memory_space<vmem>>, %arg9: memref<16x128xf32, #tpu.memory_space<vmem>>) attributes {dimension_semantics = [#tpu.dimension_semantics<parallel>], iteration_bounds = array<i64: 1>, scalar_prefetch = 0 : i64, scratch_operands = 0 : i64, tpu.core_type = #tpu.core_type<tc>, window_params = [{transform_indices = @transform_0, window_bounds = array<i64: 128, 1>}, {pipeline_mode = #tpu.pipeline_mode<synchronous>, transform_indices = @transform_1, window_bounds = array<i64: 128, 384>}, {pipeline_mode = #tpu.pipeline_mode<synchronous>, transform_indices = @transform_2, window_bounds = array<i64: 1, 128>}, {pipeline_mode = #tpu.pipeline_mode<synchronous>, transform_indices = @transform_3, window_bounds = array<i64: 128, 128>}, {pipeline_mode = #tpu.pipeline_mode<synchronous>, transform_indices = @transform_4, window_bounds = array<i64: 1, 128>}, {pipeline_mode = #tpu.pipeline_mode<synchronous>, transform_indices = @transform_5, window_bounds = array<i64: 128, 128>}, {pipeline_mode = #tpu.pipeline_mode<synchronous>, transform_indices = @transform_6, window_bounds = array<i64: 1, 128>}, {transform_indices = @transform_7, window_bounds = array<i64: 16, 128>}, {transform_indices = @transform_8, window_bounds = array<i64: 16, 128>}]} {
    %c0 = arith.constant 0 : index
    %c0_0 = arith.constant 0 : index
    %0 = vector.load %arg1[%c0, %c0_0] : memref<128x1xi32, #tpu.memory_space<vmem>>, vector<128x1xi32>
    %1 = tpu.iota {dimensions = array<i32: 1>} : vector<128x128xi32>
    %2 = vector.broadcast %0 : vector<128x1xi32> to vector<128x128xi32>
    %3 = arith.cmpi eq, %2, %1 : vector<128x128xi32>
    %4 = arith.extui %3 : vector<128x128xi1> to vector<128x128xi32>
    %5 = arith.sitofp %4 : vector<128x128xi32> to vector<128x128xf32>
    %6 = arith.truncf %5 : vector<128x128xf32> to vector<128x128xbf16>
    %c0_1 = arith.constant 0 : index
    %c0_2 = arith.constant 0 : index
    %7 = vector.load %arg2[%c0_1, %c0_2] : memref<128x384xbf16, #tpu.memory_space<vmem>>, vector<128x384xbf16>
    %cst = arith.constant dense<0.000000e+00> : vector<128x384xf32>
    %8 = tpu.matmul %6, %7, %cst {dimension_numbers = #tpu.dot_dimension_numbers<[1], [0], [0], [1], [0, 0, 1, 1], [], []>} : vector<128x128xbf16>, vector<128x384xbf16>, vector<128x384xf32> -> vector<128x384xf32>
    %9 = vector.shape_cast %8 : vector<128x384xf32> to vector<16x8x384xf32>
    %10 = vector.extract_strided_slice %9 {offsets = [0, 0, 0], sizes = [16, 8, 128], strides = [1, 1, 1]} : vector<16x8x384xf32> to vector<16x8x128xf32>
    %11 = vector.extract_strided_slice %9 {offsets = [0, 0, 128], sizes = [16, 8, 128], strides = [1, 1, 1]} : vector<16x8x384xf32> to vector<16x8x128xf32>
    %c7_i32 = arith.constant 7 : i32
    %12 = tpu.dynamic_rotate %11 by %c7_i32 dim 1 : vector<16x8x128xf32>, i32 -> vector<16x8x128xf32>
    %13 = arith.addf %10, %12 : vector<16x8x128xf32>
    %14 = vector.extract_strided_slice %9 {offsets = [0, 0, 256], sizes = [16, 8, 128], strides = [1, 1, 1]} : vector<16x8x384xf32> to vector<16x8x128xf32>
    %c6_i32 = arith.constant 6 : i32
    %15 = tpu.dynamic_rotate %14 by %c6_i32 dim 1 : vector<16x8x128xf32>, i32 -> vector<16x8x128xf32>
    %16 = arith.addf %13, %15 : vector<16x8x128xf32>
    %c0_3 = arith.constant 0 : index
    %c0_4 = arith.constant 0 : index
    %17 = vector.load %arg3[%c0_3, %c0_4] : memref<1x128xf32, #tpu.memory_space<vmem>>, vector<1x128xf32>
    %18 = vector.shape_cast %17 : vector<1x128xf32> to vector<1x1x128xf32>
    %19 = vector.broadcast %18 : vector<1x1x128xf32> to vector<16x8x128xf32>
    %20 = arith.addf %16, %19 : vector<16x8x128xf32>
    %cst_5 = arith.constant 0.000000e+00 : f32
    %21 = vector.broadcast %cst_5 : f32 to vector<16x8x128xf32>
    %22 = arith.maximumf %20, %21 : vector<16x8x128xf32>
    %23 = tpu.iota {dimensions = array<i32: 1>} : vector<1x8x1xi32>
    %c6_i32_6 = arith.constant 6 : i32
    %24 = vector.broadcast %c6_i32_6 : i32 to vector<1x8x1xi32>
    %25 = arith.cmpi slt, %23, %24 : vector<1x8x1xi32>
    %cst_7 = arith.constant 0.000000e+00 : f32
    %26 = vector.shape_cast %25 : vector<1x8x1xi1> to vector<1x8x1xi1>
    %27 = vector.broadcast %26 : vector<1x8x1xi1> to vector<16x8x128xi1>
    %28 = vector.broadcast %cst_7 : f32 to vector<16x8x128xf32>
    %29 = arith.select %27, %22, %28 : vector<16x8x128xi1>, vector<16x8x128xf32>
    %cst_8 = arith.constant dense<0.000000e+00> : vector<16x128xf32>
    %30 = vector.multi_reduction <add>, %29, %cst_8 [1] : vector<16x8x128xf32> to vector<16x128xf32>
    %cst_9 = arith.constant 0.166666672 : f32
    %31 = vector.broadcast %cst_9 : f32 to vector<16x128xf32>
    %32 = arith.mulf %30, %31 : vector<16x128xf32>
    %c0_10 = arith.constant 0 : index
    %c0_11 = arith.constant 0 : index
    %33 = vector.load %arg8[%c0_10, %c0_11] : memref<16x128xf32, #tpu.memory_space<vmem>>, vector<16x128xf32>
    tpu.vector_store %arg8[%c0_10, %c0_11], %32 {strides = array<i32>} : memref<16x128xf32, #tpu.memory_space<vmem>>, vector<16x128xf32>,
    %c0_12 = arith.constant 0 : index
    %c0_13 = arith.constant 0 : index
    %34 = vector.load %arg4[%c0_12, %c0_13] : memref<128x128xf32, #tpu.memory_space<vmem>>, vector<128x128xf32>
    %cst_14 = arith.constant dense<0.000000e+00> : vector<16x128xf32>
    %35 = tpu.matmul %32, %34, %cst_14 {dimension_numbers = #tpu.dot_dimension_numbers<[1], [0], [0], [1], [0, 0, 1, 1], [], []>} : vector<16x128xf32>, vector<128x128xf32>, vector<16x128xf32> -> vector<16x128xf32>
    %c0_15 = arith.constant 0 : index
    %c0_16 = arith.constant 0 : index
    %36 = vector.load %arg5[%c0_15, %c0_16] : memref<1x128xf32, #tpu.memory_space<vmem>>, vector<1x128xf32>
    %37 = vector.broadcast %36 : vector<1x128xf32> to vector<16x128xf32>
    %38 = arith.addf %35, %37 : vector<16x128xf32>
    %cst_17 = arith.constant 0.000000e+00 : f32
    %39 = vector.broadcast %cst_17 : f32 to vector<16x128xf32>
    %40 = arith.maximumf %38, %39 : vector<16x128xf32>
    %c0_18 = arith.constant 0 : index
    %c0_19 = arith.constant 0 : index
    %41 = vector.load %arg6[%c0_18, %c0_19] : memref<128x128xf32, #tpu.memory_space<vmem>>, vector<128x128xf32>
    %cst_20 = arith.constant dense<0.000000e+00> : vector<16x128xf32>
    %42 = tpu.matmul %40, %41, %cst_20 {dimension_numbers = #tpu.dot_dimension_numbers<[1], [0], [0], [1], [0, 0, 1, 1], [], []>} : vector<16x128xf32>, vector<128x128xf32>, vector<16x128xf32> -> vector<16x128xf32>
    %c0_21 = arith.constant 0 : index
    %c0_22 = arith.constant 0 : index
    %43 = vector.load %arg7[%c0_21, %c0_22] : memref<1x128xf32, #tpu.memory_space<vmem>>, vector<1x128xf32>
    %44 = vector.broadcast %43 : vector<1x128xf32> to vector<16x128xf32>
    %45 = arith.addf %42, %44 : vector<16x128xf32>
    %cst_23 = arith.constant dense<0xFF800000> : vector<16xf32>
    %46 = vector.multi_reduction <maximumf>, %45, %cst_23 [1] : vector<16x128xf32> to vector<16xf32>
    %47 = vector.shape_cast %46 : vector<16xf32> to vector<16x1xf32>
    %48 = vector.broadcast %47 : vector<16x1xf32> to vector<16x128xf32>
    %49 = arith.subf %45, %48 : vector<16x128xf32>
    %50 = math.exp %49 : vector<16x128xf32>
    %cst_24 = arith.constant dense<0.000000e+00> : vector<16xf32>
    %51 = vector.multi_reduction <add>, %50, %cst_24 [1] : vector<16x128xf32> to vector<16xf32>
    %52 = vector.shape_cast %51 : vector<16xf32> to vector<16x1xf32>
    %53 = math.log %52 : vector<16x1xf32>
    %54 = vector.broadcast %53 : vector<16x1xf32> to vector<16x128xf32>
    %55 = arith.subf %49, %54 : vector<16x128xf32>
    %c0_25 = arith.constant 0 : index
    %c0_26 = arith.constant 0 : index
    %56 = vector.load %arg9[%c0_25, %c0_26] : memref<16x128xf32, #tpu.memory_space<vmem>>, vector<16x128xf32>
    tpu.vector_store %arg9[%c0_25, %c0_26], %55 {strides = array<i32>} : memref<16x128xf32, #tpu.memory_space<vmem>>, vector<16x128xf32>,
    return
  }
  func.func @transform_0(%arg0: i32) -> (i32, i32) {
    %c0_i32 = arith.constant 0 : i32
    %c0_i32_0 = arith.constant 0 : i32
    return %arg0, %c0_i32 : i32, i32
  }
  func.func @transform_1(%arg0: i32) -> (i32, i32) {
    %c0_i32 = arith.constant 0 : i32
    %c0_i32_0 = arith.constant 0 : i32
    %c0_i32_1 = arith.constant 0 : i32
    return %c0_i32, %c0_i32_0 : i32, i32
  }
  func.func @transform_2(%arg0: i32) -> (i32, i32) {
    %c0_i32 = arith.constant 0 : i32
    %c0_i32_0 = arith.constant 0 : i32
    %c0_i32_1 = arith.constant 0 : i32
    return %c0_i32, %c0_i32_0 : i32, i32
  }
  func.func @transform_3(%arg0: i32) -> (i32, i32) {
    %c0_i32 = arith.constant 0 : i32
    %c0_i32_0 = arith.constant 0 : i32
    %c0_i32_1 = arith.constant 0 : i32
    return %c0_i32, %c0_i32_0 : i32, i32
  }
  func.func @transform_4(%arg0: i32) -> (i32, i32) {
    %c0_i32 = arith.constant 0 : i32
    %c0_i32_0 = arith.constant 0 : i32
    %c0_i32_1 = arith.constant 0 : i32
    return %c0_i32, %c0_i32_0 : i32, i32
  }
  func.func @transform_5(%arg0: i32) -> (i32, i32) {
    %c0_i32 = arith.constant 0 : i32
    %c0_i32_0 = arith.constant 0 : i32
    %c0_i32_1 = arith.constant 0 : i32
    return %c0_i32, %c0_i32_0 : i32, i32
  }
  func.func @transform_6(%arg0: i32) -> (i32, i32) {
    %c0_i32 = arith.constant 0 : i32
    %c0_i32_0 = arith.constant 0 : i32
    %c0_i32_1 = arith.constant 0 : i32
    return %c0_i32, %c0_i32_0 : i32, i32
  }
  func.func @transform_7(%arg0: i32) -> (i32, i32) {
    %c0_i32 = arith.constant 0 : i32
    %c0_i32_0 = arith.constant 0 : i32
    return %arg0, %c0_i32 : i32, i32
  }
  func.func @transform_8(%arg0: i32) -> (i32, i32) {
    %c0_i32 = arith.constant 0 : i32
    %c0_i32_0 = arith.constant 0 : i32
    return %arg0, %c0_i32 : i32, i32
  }
}

</mosaic_0001>

<llo_original>
// kernel: tpu_custom_call.1
$region0: #{tpu_custom_call.1}
  #allocation0 [shape = 'u32[]', space=smem, size = 0x4, offset = 0x4, fixed_abs, tag = 'smem constant byte address 0x4 - core index']
  #allocation1 [shape = 'u32[144,128]{1,0:T(1,128)}', space=vmem, size = 0x12000, scoped, tag = 'internal scratch']
  %s0 = inlined_call_operand.vmem [shape: s32[128,1], index: 0, kind: input, shape index: {}]
  %s1 = inlined_call_operand.hbm [shape: bf16[128,384], index: 1, kind: input, shape index: {}]
  %s2 = inlined_call_operand.vmem [shape: f32[1,128], index: 2, kind: input, shape index: {}]
  %s3 = inlined_call_operand.vmem [shape: f32[128,128], index: 3, kind: input, shape index: {}]
  %s4 = inlined_call_operand.vmem [shape: f32[1,128], index: 4, kind: input, shape index: {}]
  %s5 = inlined_call_operand.hbm [shape: f32[128,128], index: 5, kind: input, shape index: {}]
  %s6 = inlined_call_operand.vmem [shape: f32[1,128], index: 6, kind: input, shape index: {}]
  %s7 = inlined_call_operand.hbm [shape: f32[16,128], index: 7, kind: output, shape index: {0}]
  %s8 = inlined_call_operand.hbm [shape: f32[16,128], index: 8, kind: output, shape index: {1}]
  %9 = xla_tuple %s7, %s8
  %s10 = sld [smem:[#allocation0]]
  $region54: #{tpu_custom_call.1} parent=0
    _
  %s12 = ssub.s32 1, %s10
  %s13 = scalar_select 0, %s12, %s10
  $region1: #{tpu_custom_call.1} parent=0
    #allocation2 [shape = 'u8[98304]{0}', space=vmem, size = 0x18000, scoped, tag = 'input window, operand 1, single buffered']
    #allocation3 [shape = 's32[1]{0}', space=sflag, size = 0x4, scoped, tag = 'scoped memory for tpu_custom_call.1']
    #allocation4 [shape = 's32[1]{0}', space=sflag, size = 0x4, scoped, tag = 'scoped memory for tpu_custom_call.1']
    #allocation5 [shape = 'u8[65536]{0}', space=vmem, size = 0x10000, scoped, tag = 'input window, operand 5, single buffered']
    #allocation6 [shape = 's32[1]{0}', space=sflag, size = 0x4, scoped, tag = 'scoped memory for tpu_custom_call.1']
    #allocation7 [shape = 'u8[8192]{0}', space=vmem, size = 0x2000, scoped, tag = 'output window, operand 0, single buffered']
    #allocation8 [shape = 'u8[8192]{0}', space=vmem, size = 0x2000, scoped, tag = 'output window, operand 1, single buffered']
    #allocation9 [shape = 's32[1]{0}', space=sflag, size = 0x4, scoped, tag = 'scoped memory for tpu_custom_call.1']
    %14 = vsyncpa [#allocation3], 0
    %15 = vsyncpa [#allocation6], 0
    %16 = vsyncpa [#allocation4], 0
    %17 = vsyncpa [#allocation9], 0
    // Predicated region
    $region2: #{tpu_custom_call.1} parent=1 // pred_check
      _
    $region3: #{tpu_custom_call.1} parent=1 // pred_check_branch
      %19 = sbr.rel (0) target = $region5
    $region4: #{tpu_custom_call.1} parent=1 // pred_region
      _
    $region5: #{tpu_custom_call.1} parent=1 // pred_fallthru
      _
    // Predicated region
    $region6: #{tpu_custom_call.1} parent=1 // pred_check
      _
    $region7: #{tpu_custom_call.1} parent=1 // pred_check_branch
      %21 = sbr.rel (0) target = $region9
    $region8: #{tpu_custom_call.1} parent=1 // pred_region
      %s23 = ssub.s32 3072, 3072
      %24 = vsyncadd [#allocation3], %s23
      %s25 = sshll.u32 [#allocation2], 4
      %s26 = int_to_ptr.vmem [resolvable:$true] %s25
      %31 = dma.hbm_to_vmem [thread:$0]  %s1, 3072, %s26, [#allocation3], 192, 192, 12
    $region9: #{tpu_custom_call.1} parent=1 // pred_fallthru
      _
    // Predicated region
    $region10: #{tpu_custom_call.1} parent=1 // pred_check
      _
    $region11: #{tpu_custom_call.1} parent=1 // pred_check_branch
      %33 = sbr.rel (0) target = $region13
    $region12: #{tpu_custom_call.1} parent=1 // pred_region
      _
    $region13: #{tpu_custom_call.1} parent=1 // pred_fallthru
      _
    // Predicated region
    $region14: #{tpu_custom_call.1} parent=1 // pred_check
      _
    $region15: #{tpu_custom_call.1} parent=1 // pred_check_branch
      %35 = sbr.rel (0) target = $region17
    $region16: #{tpu_custom_call.1} parent=1 // pred_region
      _
    $region17: #{tpu_custom_call.1} parent=1 // pred_fallthru
      _
    // Predicated region
    $region18: #{tpu_custom_call.1} parent=1 // pred_check
      _
    $region19: #{tpu_custom_call.1} parent=1 // pred_check_branch
      %37 = sbr.rel (0) target = $region21
    $region20: #{tpu_custom_call.1} parent=1 // pred_region
      _
    $region21: #{tpu_custom_call.1} parent=1 // pred_fallthru
      _
    // Predicated region
    $region22: #{tpu_custom_call.1} parent=1 // pred_check
      _
    $region23: #{tpu_custom_call.1} parent=1 // pred_check_branch
      %39 = sbr.rel (0) target = $region25
    $region24: #{tpu_custom_call.1} parent=1 // pred_region
      %s41 = ssub.s32 2048, 2048
      %42 = vsyncadd [#allocation6], %s41
      %s43 = sshll.u32 [#allocation5], 4
      %s44 = int_to_ptr.vmem [resolvable:$true] %s43
      %49 = dma.hbm_to_vmem [thread:$0]  %s5, 2048, %s44, [#allocation6], 128, 128, 8
    $region25: #{tpu_custom_call.1} parent=1 // pred_fallthru
      _
    // Predicated region
    $region26: #{tpu_custom_call.1} parent=1 // pred_check
      _
    $region27: #{tpu_custom_call.1} parent=1 // pred_check_branch
      %51 = sbr.rel (0) target = $region29
    $region28: #{tpu_custom_call.1} parent=1 // pred_region
      _
    $region29: #{tpu_custom_call.1} parent=1 // pred_fallthru
      _
    // Predicated region
    $region30: #{tpu_custom_call.1} parent=1 // pred_check
      _
    $region31: #{tpu_custom_call.1} parent=1 // pred_check_branch
      %53 = sbr.rel (0) target = $region33
    $region32: #{tpu_custom_call.1} parent=1 // pred_region
      %54 = dma.done [#allocation3], 3072
    $region33: #{tpu_custom_call.1} parent=1 // pred_fallthru
      _
    // Predicated region
    $region34: #{tpu_custom_call.1} parent=1 // pred_check
      _
    $region35: #{tpu_custom_call.1} parent=1 // pred_check_branch
      %56 = sbr.rel (0) target = $region37
    $region36: #{tpu_custom_call.1} parent=1 // pred_region
      %57 = dma.done [#allocation6], 2048
    $region37: #{tpu_custom_call.1} parent=1 // pred_fallthru
      _
    %v59 = vld [vmem:[%s0] sm:$0xff]
    %v60 = vld [vmem:[%s0 + $0x8] sm:$0xff]
    %v61 = vld [vmem:[%s0 + $0x10] sm:$0xff]
    %v62 = vld [vmem:[%s0 + $0x18] sm:$0xff]
    %v63 = vld [vmem:[%s0 + $0x20] sm:$0xff]
    %v64 = vld [vmem:[%s0 + $0x28] sm:$0xff]
    %v65 = vld [vmem:[%s0 + $0x30] sm:$0xff]
    %v66 = vld [vmem:[%s0 + $0x38] sm:$0xff]
    %v67 = vld [vmem:[%s0 + $0x40] sm:$0xff]
    %v68 = vld [vmem:[%s0 + $0x48] sm:$0xff]
    %v69 = vld [vmem:[%s0 + $0x50] sm:$0xff]
    %v70 = vld [vmem:[%s0 + $0x58] sm:$0xff]
    %v71 = vld [vmem:[%s0 + $0x60] sm:$0xff]
    %v72 = vld [vmem:[%s0 + $0x68] sm:$0xff]
    %v73 = vld [vmem:[%s0 + $0x70] sm:$0xff]
    %v74 = vld [vmem:[%s0 + $0x78] sm:$0xff]
    %v75 = vlaneseq
    %v76 = vand.u32 %v75, 127
    %77 = vset.pattern.permute.xlu0 0
    %78 = vperm.xlu0 %77, %v59
    %v79 = vpop.permute.xlu0 %78
    %80 = vset.pattern.permute.xlu0 0
    %81 = vperm.xlu0 %80, %v60
    %v82 = vpop.permute.xlu0 %81
    %83 = vset.pattern.permute.xlu0 0
    %84 = vperm.xlu0 %83, %v61
    %v85 = vpop.permute.xlu0 %84
    %86 = vset.pattern.permute.xlu0 0
    %87 = vperm.xlu0 %86, %v62
    %v88 = vpop.permute.xlu0 %87
    %89 = vset.pattern.permute.xlu0 0
    %90 = vperm.xlu0 %89, %v63
    %v91 = vpop.permute.xlu0 %90
    %92 = vset.pattern.permute.xlu0 0
    %93 = vperm.xlu0 %92, %v64
    %v94 = vpop.permute.xlu0 %93
    %95 = vset.pattern.permute.xlu0 0
    %96 = vperm.xlu0 %95, %v65
    %v97 = vpop.permute.xlu0 %96
    %98 = vset.pattern.permute.xlu0 0
    %99 = vperm.xlu0 %98, %v66
    %v100 = vpop.permute.xlu0 %99
    %101 = vset.pattern.permute.xlu0 0
    %102 = vperm.xlu0 %101, %v67
    %v103 = vpop.permute.xlu0 %102
    %104 = vset.pattern.permute.xlu0 0
    %105 = vperm.xlu0 %104, %v68
    %v106 = vpop.permute.xlu0 %105
    %107 = vset.pattern.permute.xlu0 0
    %108 = vperm.xlu0 %107, %v69
    %v109 = vpop.permute.xlu0 %108
    %110 = vset.pattern.permute.xlu0 0
    %111 = vperm.xlu0 %110, %v70
    %v112 = vpop.permute.xlu0 %111
    %113 = vset.pattern.permute.xlu0 0
    %114 = vperm.xlu0 %113, %v71
    %v115 = vpop.permute.xlu0 %114
    %116 = vset.pattern.permute.xlu0 0
    %117 = vperm.xlu0 %116, %v72
    %v118 = vpop.permute.xlu0 %117
    %119 = vset.pattern.permute.xlu0 0
    %120 = vperm.xlu0 %119, %v73
    %v121 = vpop.permute.xlu0 %120
    %122 = vset.pattern.permute.xlu0 0
    %123 = vperm.xlu0 %122, %v74
    %v124 = vpop.permute.xlu0 %123
    %vm125 = vcmp.eq.s32.totalorder %v79, %v76
    %vm126 = vcmp.eq.s32.totalorder %v82, %v76
    %vm127 = vcmp.eq.s32.totalorder %v85, %v76
    %vm128 = vcmp.eq.s32.totalorder %v88, %v76
    %vm129 = vcmp.eq.s32.totalorder %v91, %v76
    %vm130 = vcmp.eq.s32.totalorder %v94, %v76
    %vm131 = vcmp.eq.s32.totalorder %v97, %v76
    %vm132 = vcmp.eq.s32.totalorder %v100, %v76
    %vm133 = vcmp.eq.s32.totalorder %v103, %v76
    %vm134 = vcmp.eq.s32.totalorder %v106, %v76
    %vm135 = vcmp.eq.s32.totalorder %v109, %v76
    %vm136 = vcmp.eq.s32.totalorder %v112, %v76
    %vm137 = vcmp.eq.s32.totalorder %v115, %v76
    %vm138 = vcmp.eq.s32.totalorder %v118, %v76
    %vm139 = vcmp.eq.s32.totalorder %v121, %v76
    %vm140 = vcmp.eq.s32.totalorder %v124, %v76
    %v141 = vsel %vm125, 1, 0
    %v142 = vsel %vm126, 1, 0
    %v143 = vsel %vm127, 1, 0
    %v144 = vsel %vm128, 1, 0
    %v145 = vsel %vm129, 1, 0
    %v146 = vsel %vm130, 1, 0
    %v147 = vsel %vm131, 1, 0
    %v148 = vsel %vm132, 1, 0
    %v149 = vsel %vm133, 1, 0
    %v150 = vsel %vm134, 1, 0
    %v151 = vsel %vm135, 1, 0
    %v152 = vsel %vm136, 1, 0
    %v153 = vsel %vm137, 1, 0
    %v154 = vsel %vm138, 1, 0
    %v155 = vsel %vm139, 1, 0
    %v156 = vsel %vm140, 1, 0
    %v157 = vcvt.s32.f32 %v141
    %v158 = vcvt.s32.f32 %v142
    %v159 = vcvt.s32.f32 %v143
    %v160 = vcvt.s32.f32 %v144
    %v161 = vcvt.s32.f32 %v145
    %v162 = vcvt.s32.f32 %v146
    %v163 = vcvt.s32.f32 %v147
    %v164 = vcvt.s32.f32 %v148
    %v165 = vcvt.s32.f32 %v149
    %v166 = vcvt.s32.f32 %v150
    %v167 = vcvt.s32.f32 %v151
    %v168 = vcvt.s32.f32 %v152
    %v169 = vcvt.s32.f32 %v153
    %v170 = vcvt.s32.f32 %v154
    %v171 = vcvt.s32.f32 %v155
    %v172 = vcvt.s32.f32 %v156
    %v173 = vpack.c.bf16 %v158, %v157
    %v174 = vpack.c.bf16 %v160, %v159
    %v175 = vpack.c.bf16 %v162, %v161
    %v176 = vpack.c.bf16 %v164, %v163
    %v177 = vpack.c.bf16 %v166, %v165
    %v178 = vpack.c.bf16 %v168, %v167
    %v179 = vpack.c.bf16 %v170, %v169
    %v180 = vpack.c.bf16 %v172, %v171
    %v181 = vld [vmem:[#allocation2] sm:$0xff]
    %v182 = vld [vmem:[#allocation2 + $0x8] sm:$0xf]
    %v183 = vld [vmem:[#allocation2 + $0xc] sm:$0xff]
    %v184 = vld [vmem:[#allocation2 + $0x14] sm:$0xf]
    %v185 = vld [vmem:[#allocation2 + $0x18] sm:$0xff]
    %v186 = vld [vmem:[#allocation2 + $0x20] sm:$0xf]
    %v187 = vld [vmem:[#allocation2 + $0x24] sm:$0xff]
    %v188 = vld [vmem:[#allocation2 + $0x2c] sm:$0xf]
    %v189 = vld [vmem:[#allocation2 + $0x30] sm:$0xff]
    %v190 = vld [vmem:[#allocation2 + $0x38] sm:$0xf]
    %v191 = vld [vmem:[#allocation2 + $0x3c] sm:$0xff]
    %v192 = vld [vmem:[#allocation2 + $0x44] sm:$0xf]
    %v193 = vld [vmem:[#allocation2 + $0x48] sm:$0xff]
    %v194 = vld [vmem:[#allocation2 + $0x50] sm:$0xf]
    %v195 = vld [vmem:[#allocation2 + $0x54] sm:$0xff]
    %v196 = vld [vmem:[#allocation2 + $0x5c] sm:$0xf]
    %v197 = vld [vmem:[#allocation2 + $0x60] sm:$0xff]
    %v198 = vld [vmem:[#allocation2 + $0x68] sm:$0xf]
    %v199 = vld [vmem:[#allocation2 + $0x6c] sm:$0xff]
    %v200 = vld [vmem:[#allocation2 + $0x74] sm:$0xf]
    %v201 = vld [vmem:[#allocation2 + $0x78] sm:$0xff]
    %v202 = vld [vmem:[#allocation2 + $0x80] sm:$0xf]
    %v203 = vld [vmem:[#allocation2 + $0x84] sm:$0xff]
    %v204 = vld [vmem:[#allocation2 + $0x8c] sm:$0xf]
    %v205 = vld [vmem:[#allocation2 + $0x90] sm:$0xff]
    %v206 = vld [vmem:[#allocation2 + $0x98] sm:$0xf]
    %v207 = vld [vmem:[#allocation2 + $0x9c] sm:$0xff]
    %v208 = vld [vmem:[#allocation2 + $0xa4] sm:$0xf]
    %v209 = vld [vmem:[#allocation2 + $0xa8] sm:$0xff]
    %v210 = vld [vmem:[#allocation2 + $0xb0] sm:$0xf]
    %v211 = vld [vmem:[#allocation2 + $0xb4] sm:$0xff]
    %v212 = vld [vmem:[#allocation2 + $0xbc] sm:$0xf]
    %v245 = vunpack.c.l.b16 %v181
    %v246 = vunpack.c.h.b16 %v181
    %v247 = vunpack.c.l.b16 %v182
    %v248 = vunpack.c.l.b16 %v183
    %v249 = vunpack.c.h.b16 %v183
    %v250 = vunpack.c.l.b16 %v184
    %v251 = vunpack.c.l.b16 %v185
    %v252 = vunpack.c.h.b16 %v185
    %v253 = vunpack.c.l.b16 %v186
    %v254 = vunpack.c.l.b16 %v187
    %v255 = vunpack.c.h.b16 %v187
    %v256 = vunpack.c.l.b16 %v188
    %v257 = vunpack.c.l.b16 %v189
    %v258 = vunpack.c.h.b16 %v189
    %v259 = vunpack.c.l.b16 %v190
    %v260 = vunpack.c.l.b16 %v191
    %v261 = vunpack.c.h.b16 %v191
    %v262 = vunpack.c.l.b16 %v192
    %v263 = vunpack.c.l.b16 %v193
    %v264 = vunpack.c.h.b16 %v193
    %v265 = vunpack.c.l.b16 %v194
    %v266 = vunpack.c.l.b16 %v195
    %v267 = vunpack.c.h.b16 %v195
    %v268 = vunpack.c.l.b16 %v196
    %v269 = vunpack.c.l.b16 %v197
    %v270 = vunpack.c.h.b16 %v197
    %v271 = vunpack.c.l.b16 %v198
    %v272 = vunpack.c.l.b16 %v199
    %v273 = vunpack.c.h.b16 %v199
    %v274 = vunpack.c.l.b16 %v200
    %v275 = vunpack.c.l.b16 %v201
    %v276 = vunpack.c.h.b16 %v201
    %v277 = vunpack.c.l.b16 %v202
    %v278 = vunpack.c.l.b16 %v203
    %v279 = vunpack.c.h.b16 %v203
    %v280 = vunpack.c.l.b16 %v204
    %v281 = vunpack.c.l.b16 %v205
    %v282 = vunpack.c.h.b16 %v205
    %v283 = vunpack.c.l.b16 %v206
    %v284 = vunpack.c.l.b16 %v207
    %v285 = vunpack.c.h.b16 %v207
    %v286 = vunpack.c.l.b16 %v208
    %v287 = vunpack.c.l.b16 %v209
    %v288 = vunpack.c.h.b16 %v209
    %v289 = vunpack.c.l.b16 %v210
    %v290 = vunpack.c.l.b16 %v211
    %v291 = vunpack.c.h.b16 %v211
    %v292 = vunpack.c.l.b16 %v212
    %v293 = vpack.c.b16 %v248, %v245
    %v294 = vpack.c.b16 %v249, %v246
    %v295 = vpack.c.b16 %v250, %v247
    %v296 = vpack.c.b16 %v254, %v251
    %v297 = vpack.c.b16 %v255, %v252
    %v298 = vpack.c.b16 %v256, %v253
    %v299 = vpack.c.b16 %v260, %v257
    %v300 = vpack.c.b16 %v261, %v258
    %v301 = vpack.c.b16 %v262, %v259
    %v302 = vpack.c.b16 %v266, %v263
    %v303 = vpack.c.b16 %v267, %v264
    %v304 = vpack.c.b16 %v268, %v265
    %v305 = vpack.c.b16 %v272, %v269
    %v306 = vpack.c.b16 %v273, %v270
    %v307 = vpack.c.b16 %v274, %v271
    %v308 = vpack.c.b16 %v278, %v275
    %v309 = vpack.c.b16 %v279, %v276
    %v310 = vpack.c.b16 %v280, %v277
    %v311 = vpack.c.b16 %v284, %v281
    %v312 = vpack.c.b16 %v285, %v282
    %v313 = vpack.c.b16 %v286, %v283
    %v314 = vpack.c.b16 %v290, %v287
    %v315 = vpack.c.b16 %v291, %v288
    %v316 = vpack.c.b16 %v292, %v289
    %341 = vmatprep.subr.bf16.mxu0 %v294
    %342 = vmatpush1.bf16.msra.mxu0 %v293
    %343 = vmatprep.subr.bf16.mxu0 %v297
    %344 = vmatpush1.bf16.msra.mxu0 %v296
    %345 = vmatprep.subr.bf16.mxu0 %v300
    %346 = vmatpush1.bf16.msra.mxu0 %v299
    %347 = vmatprep.subr.bf16.mxu0 %v303
    %348 = vmatpush1.bf16.msra.mxu0 %v302
    %349 = vmatprep.subr.bf16.mxu0 %v306
    %350 = vmatpush1.bf16.msra.mxu0 %v305
    %351 = vmatprep.subr.bf16.mxu0 %v309
    %352 = vmatpush1.bf16.msra.mxu0 %v308
    %353 = vmatprep.subr.bf16.mxu0 %v312
    %354 = vmatpush1.bf16.msra.mxu0 %v311
    %355 = vmatprep.subr.bf16.mxu0 %v315
    %356 = vmatpush1.bf16.msra.mxu0 %v314
    %357 = vmatprep.subr.bf16.mxu0 0
    %358 = vmatpush1.bf16.msra.mxu0 0
    %359 = vmatprep.subr.bf16.mxu0 0
    %360 = vmatpush1.bf16.msra.mxu0 0
    %361 = vmatprep.subr.bf16.mxu0 0
    %362 = vmatpush1.bf16.msra.mxu0 0
    %363 = vmatprep.subr.bf16.mxu0 0
    %364 = vmatpush1.bf16.msra.mxu0 0
    %365 = vmatprep.subr.bf16.mxu0 0
    %366 = vmatpush1.bf16.msra.mxu0 0
    %367 = vmatprep.subr.bf16.mxu0 0
    %368 = vmatpush1.bf16.msra.mxu0 0
    %369 = vmatprep.subr.bf16.mxu0 0
    %370 = vmatpush1.bf16.msra.mxu0 0
    %371 = vmatprep.subr.bf16.mxu0 0
    %372 = vmatpush1.bf16.msra.mxu0 0
    %373 = vmatprep.mubr.bf16.mxu0 0
    %374 = vmatmul.mubr.bf16.gmra.mrb[0].mxu0 %v173
    %v375 = vpop.f32.mrb[0].mxu0
    %v376 = vadd.f32 0.0, %v375
    %v377 = vpop.f32.mrb[0].mxu0
    %v378 = vadd.f32 0.0, %v377
    %v379 = vpop.f32.mrb[0].mxu0
    %v380 = vadd.f32 0.0, %v379
    %v381 = vpop.f32.mrb[0].mxu0
    %v382 = vadd.f32 0.0, %v381
    %383 = vmatprep.mubr.bf16.mxu0 0
    %384 = vmatmul.mubr.bf16.gmra.mrb[0].mxu0 %v174
    %v385 = vpop.f32.mrb[0].mxu0
    %v386 = vadd.f32 0.0, %v385
    %v387 = vpop.f32.mrb[0].mxu0
    %v388 = vadd.f32 0.0, %v387
    %v389 = vpop.f32.mrb[0].mxu0
    %v390 = vadd.f32 0.0, %v389
    %v391 = vpop.f32.mrb[0].mxu0
    %v392 = vadd.f32 0.0, %v391
    %393 = vmatprep.mubr.bf16.mxu0 0
    %394 = vmatmul.mubr.bf16.gmra.mrb[0].mxu0 %v175
    %v395 = vpop.f32.mrb[0].mxu0
    %v396 = vadd.f32 0.0, %v395
    %v397 = vpop.f32.mrb[0].mxu0
    %v398 = vadd.f32 0.0, %v397
    %v399 = vpop.f32.mrb[0].mxu0
    %v400 = vadd.f32 0.0, %v399
    %v401 = vpop.f32.mrb[0].mxu0
    %v402 = vadd.f32 0.0, %v401
    %403 = vmatprep.mubr.bf16.mxu0 0
    %404 = vmatmul.mubr.bf16.gmra.mrb[0].mxu0 %v176
    %v405 = vpop.f32.mrb[0].mxu0
    %v406 = vadd.f32 0.0, %v405
    %v407 = vpop.f32.mrb[0].mxu0
    %v408 = vadd.f32 0.0, %v407
    %v409 = vpop.f32.mrb[0].mxu0
    %v410 = vadd.f32 0.0, %v409
    %v411 = vpop.f32.mrb[0].mxu0
    %v412 = vadd.f32 0.0, %v411
    %413 = vmatprep.mubr.bf16.mxu0 0
    %414 = vmatmul.mubr.bf16.gmra.mrb[0].mxu0 %v177
    %v415 = vpop.f32.mrb[0].mxu0
    %v416 = vadd.f32 0.0, %v415
    %v417 = vpop.f32.mrb[0].mxu0
    %v418 = vadd.f32 0.0, %v417
    %v419 = vpop.f32.mrb[0].mxu0
    %v420 = vadd.f32 0.0, %v419
    %v421 = vpop.f32.mrb[0].mxu0
    %v422 = vadd.f32 0.0, %v421
    %423 = vmatprep.mubr.bf16.mxu0 0
    %424 = vmatmul.mubr.bf16.gmra.mrb[0].mxu0 %v178
    %v425 = vpop.f32.mrb[0].mxu0
    %v426 = vadd.f32 0.0, %v425
    %v427 = vpop.f32.mrb[0].mxu0
    %v428 = vadd.f32 0.0, %v427
    %v429 = vpop.f32.mrb[0].mxu0
    %v430 = vadd.f32 0.0, %v429
    %v431 = vpop.f32.mrb[0].mxu0
    %v432 = vadd.f32 0.0, %v431
    %433 = vmatprep.mubr.bf16.mxu0 0
    %434 = vmatmul.mubr.bf16.gmra.mrb[0].mxu0 %v179
    %v435 = vpop.f32.mrb[0].mxu0
    %v436 = vadd.f32 0.0, %v435
    %v437 = vpop.f32.mrb[0].mxu0
    %v438 = vadd.f32 0.0, %v437
    %v439 = vpop.f32.mrb[0].mxu0
    %v440 = vadd.f32 0.0, %v439
    %v441 = vpop.f32.mrb[0].mxu0
    %v442 = vadd.f32 0.0, %v441
    %443 = vmatprep.mubr.bf16.mxu0 0
    %444 = vmatmul.mubr.bf16.gmra.mrb[0].mxu0 %v180
    %v445 = vpop.f32.mrb[0].mxu0
    %v446 = vadd.f32 0.0, %v445
    %v447 = vpop.f32.mrb[0].mxu0
    %v448 = vadd.f32 0.0, %v447
    %v449 = vpop.f32.mrb[0].mxu0
    %v450 = vadd.f32 0.0, %v449
    %v451 = vpop.f32.mrb[0].mxu0
    %v452 = vadd.f32 0.0, %v451
    %453 = vdwg.mxu0
    %454 = vmatprep.subr.bf16.mxu0 0
    %455 = vmatpush1.bf16.msra.mxu0 %v295
    %456 = vmatprep.subr.bf16.mxu0 0
    %457 = vmatpush1.bf16.msra.mxu0 %v298
    %458 = vmatprep.subr.bf16.mxu0 0
    %459 = vmatpush1.bf16.msra.mxu0 %v301
    %460 = vmatprep.subr.bf16.mxu0 0
    %461 = vmatpush1.bf16.msra.mxu0 %v304
    %462 = vmatprep.subr.bf16.mxu0 0
    %463 = vmatpush1.bf16.msra.mxu0 %v307
    %464 = vmatprep.subr.bf16.mxu0 0
    %465 = vmatpush1.bf16.msra.mxu0 %v310
    %466 = vmatprep.subr.bf16.mxu0 0
    %467 = vmatpush1.bf16.msra.mxu0 %v313
    %468 = vmatprep.subr.bf16.mxu0 0
    %469 = vmatpush1.bf16.msra.mxu0 %v316
    %470 = vmatprep.subr.bf16.mxu0 0
    %471 = vmatpush1.bf16.msra.mxu0 0
    %472 = vmatprep.subr.bf16.mxu0 0
    %473 = vmatpush1.bf16.msra.mxu0 0
    %474 = vmatprep.subr.bf16.mxu0 0
    %475 = vmatpush1.bf16.msra.mxu0 0
    %476 = vmatprep.subr.bf16.mxu0 0
    %477 = vmatpush1.bf16.msra.mxu0 0
    %478 = vmatprep.subr.bf16.mxu0 0
    %479 = vmatpush1.bf16.msra.mxu0 0
    %480 = vmatprep.subr.bf16.mxu0 0
    %481 = vmatpush1.bf16.msra.mxu0 0
    %482 = vmatprep.subr.bf16.mxu0 0
    %483 = vmatpush1.bf16.msra.mxu0 0
    %484 = vmatprep.subr.bf16.mxu0 0
    %485 = vmatpush1.bf16.msra.mxu0 0
    %486 = vmatprep.mubr.bf16.mxu0 0
    %487 = vmatmul.mubr.bf16.gmra.mrb[0].mxu0 %v173
    %v488 = vpop.f32.mrb[0].mxu0
    %v489 = vadd.f32 0.0, %v488
    %v490 = vpop.f32.mrb[0].mxu0
    %v491 = vpop.f32.mrb[0].mxu0
    %v492 = vadd.f32 0.0, %v491
    %v493 = vpop.f32.mrb[0].mxu0
    %494 = vmatprep.mubr.bf16.mxu0 0
    %495 = vmatmul.mubr.bf16.gmra.mrb[0].mxu0 %v174
    %v496 = vpop.f32.mrb[0].mxu0
    %v497 = vadd.f32 0.0, %v496
    %v498 = vpop.f32.mrb[0].mxu0
    %v499 = vpop.f32.mrb[0].mxu0
    %v500 = vadd.f32 0.0, %v499
    %v501 = vpop.f32.mrb[0].mxu0
    %502 = vmatprep.mubr.bf16.mxu0 0
    %503 = vmatmul.mubr.bf16.gmra.mrb[0].mxu0 %v175
    %v504 = vpop.f32.mrb[0].mxu0
    %v505 = vadd.f32 0.0, %v504
    %v506 = vpop.f32.mrb[0].mxu0
    %v507 = vpop.f32.mrb[0].mxu0
    %v508 = vadd.f32 0.0, %v507
    %v509 = vpop.f32.mrb[0].mxu0
    %510 = vmatprep.mubr.bf16.mxu0 0
    %511 = vmatmul.mubr.bf16.gmra.mrb[0].mxu0 %v176
    %v512 = vpop.f32.mrb[0].mxu0
    %v513 = vadd.f32 0.0, %v512
    %v514 = vpop.f32.mrb[0].mxu0
    %v515 = vpop.f32.mrb[0].mxu0
    %v516 = vadd.f32 0.0, %v515
    %v517 = vpop.f32.mrb[0].mxu0
    %518 = vmatprep.mubr.bf16.mxu0 0
    %519 = vmatmul.mubr.bf16.gmra.mrb[0].mxu0 %v177
    %v520 = vpop.f32.mrb[0].mxu0
    %v521 = vadd.f32 0.0, %v520
    %v522 = vpop.f32.mrb[0].mxu0
    %v523 = vpop.f32.mrb[0].mxu0
    %v524 = vadd.f32 0.0, %v523
    %v525 = vpop.f32.mrb[0].mxu0
    %526 = vmatprep.mubr.bf16.mxu0 0
    %527 = vmatmul.mubr.bf16.gmra.mrb[0].mxu0 %v178
    %v528 = vpop.f32.mrb[0].mxu0
    %v529 = vadd.f32 0.0, %v528
    %v530 = vpop.f32.mrb[0].mxu0
    %v531 = vpop.f32.mrb[0].mxu0
    %v532 = vadd.f32 0.0, %v531
    %v533 = vpop.f32.mrb[0].mxu0
    %534 = vmatprep.mubr.bf16.mxu0 0
    %535 = vmatmul.mubr.bf16.gmra.mrb[0].mxu0 %v179
    %v536 = vpop.f32.mrb[0].mxu0
    %v537 = vadd.f32 0.0, %v536
    %v538 = vpop.f32.mrb[0].mxu0
    %v539 = vpop.f32.mrb[0].mxu0
    %v540 = vadd.f32 0.0, %v539
    %v541 = vpop.f32.mrb[0].mxu0
    %542 = vmatprep.mubr.bf16.mxu0 0
    %543 = vmatmul.mubr.bf16.gmra.mrb[0].mxu0 %v180
    %v544 = vpop.f32.mrb[0].mxu0
    %v545 = vadd.f32 0.0, %v544
    %v546 = vpop.f32.mrb[0].mxu0
    %v547 = vpop.f32.mrb[0].mxu0
    %v548 = vadd.f32 0.0, %v547
    %v549 = vpop.f32.mrb[0].mxu0
    %550 = vdwg.mxu0
    %v551 = vrot.slane %v378, 1
    %v552 = vrot.slane %v382, 1
    %v553 = vrot.slane %v388, 1
    %v554 = vrot.slane %v392, 1
    %v555 = vrot.slane %v398, 1
    %v556 = vrot.slane %v402, 1
    %v557 = vrot.slane %v408, 1
    %v558 = vrot.slane %v412, 1
    %v559 = vrot.slane %v418, 1
    %v560 = vrot.slane %v422, 1
    %v561 = vrot.slane %v428, 1
    %v562 = vrot.slane %v432, 1
    %v563 = vrot.slane %v438, 1
    %v564 = vrot.slane %v442, 1
    %v565 = vrot.slane %v448, 1
    %v566 = vrot.slane %v452, 1
    %v567 = vadd.f32 %v376, %v551
    %v568 = vadd.f32 %v380, %v552
    %v569 = vadd.f32 %v386, %v553
    %v570 = vadd.f32 %v390, %v554
    %v571 = vadd.f32 %v396, %v555
    %v572 = vadd.f32 %v400, %v556
    %v573 = vadd.f32 %v406, %v557
    %v574 = vadd.f32 %v410, %v558
    %v575 = vadd.f32 %v416, %v559
    %v576 = vadd.f32 %v420, %v560
    %v577 = vadd.f32 %v426, %v561
    %v578 = vadd.f32 %v430, %v562
    %v579 = vadd.f32 %v436, %v563
    %v580 = vadd.f32 %v440, %v564
    %v581 = vadd.f32 %v446, %v565
    %v582 = vadd.f32 %v450, %v566
    %v583 = vrot.slane %v489, 2
    %v584 = vrot.slane %v492, 2
    %v585 = vrot.slane %v497, 2
    %v586 = vrot.slane %v500, 2
    %v587 = vrot.slane %v505, 2
    %v588 = vrot.slane %v508, 2
    %v589 = vrot.slane %v513, 2
    %v590 = vrot.slane %v516, 2
    %v591 = vrot.slane %v521, 2
    %v592 = vrot.slane %v524, 2
    %v593 = vrot.slane %v529, 2
    %v594 = vrot.slane %v532, 2
    %v595 = vrot.slane %v537, 2
    %v596 = vrot.slane %v540, 2
    %v597 = vrot.slane %v545, 2
    %v598 = vrot.slane %v548, 2
    %v599 = vadd.f32 %v567, %v583
    %v600 = vadd.f32 %v568, %v584
    %v601 = vadd.f32 %v569, %v585
    %v602 = vadd.f32 %v570, %v586
    %v603 = vadd.f32 %v571, %v587
    %v604 = vadd.f32 %v572, %v588
    %v605 = vadd.f32 %v573, %v589
    %v606 = vadd.f32 %v574, %v590
    %v607 = vadd.f32 %v575, %v591
    %v608 = vadd.f32 %v576, %v592
    %v609 = vadd.f32 %v577, %v593
    %v610 = vadd.f32 %v578, %v594
    %v611 = vadd.f32 %v579, %v595
    %v612 = vadd.f32 %v580, %v596
    %v613 = vadd.f32 %v581, %v597
    %v614 = vadd.f32 %v582, %v598
    %v615 = vld [vmem:[%s2] sm:$0x1]
    %v617 = vlaneseq
    %v618 = vshrl.u32 %v617, 7
    %v619 = vsub.s32 0, %v618
    %v620 = vrot.slane %v615, %v619
    %v622 = vadd.f32 %v599, %v620
    %v623 = vadd.f32 %v600, %v620
    %v624 = vadd.f32 %v601, %v620
    %v625 = vadd.f32 %v602, %v620
    %v626 = vadd.f32 %v603, %v620
    %v627 = vadd.f32 %v604, %v620
    %v628 = vadd.f32 %v605, %v620
    %v629 = vadd.f32 %v606, %v620
    %v630 = vadd.f32 %v607, %v620
    %v631 = vadd.f32 %v608, %v620
    %v632 = vadd.f32 %v609, %v620
    %v633 = vadd.f32 %v610, %v620
    %v634 = vadd.f32 %v611, %v620
    %v635 = vadd.f32 %v612, %v620
    %v636 = vadd.f32 %v613, %v620
    %v637 = vadd.f32 %v614, %v620
    %v638 = vmax.f32 %v622, 0.0
    %v639 = vmax.f32 %v623, 0.0
    %v640 = vmax.f32 %v624, 0.0
    %v641 = vmax.f32 %v625, 0.0
    %v642 = vmax.f32 %v626, 0.0
    %v643 = vmax.f32 %v627, 0.0
    %v644 = vmax.f32 %v628, 0.0
    %v645 = vmax.f32 %v629, 0.0
    %v646 = vmax.f32 %v630, 0.0
    %v647 = vmax.f32 %v631, 0.0
    %v648 = vmax.f32 %v632, 0.0
    %v649 = vmax.f32 %v633, 0.0
    %v650 = vmax.f32 %v634, 0.0
    %v651 = vmax.f32 %v635, 0.0
    %v652 = vmax.f32 %v636, 0.0
    %v653 = vmax.f32 %v637, 0.0
    %v654 = vlaneseq
    %v655 = vshrl.u32 %v654, 7
    %vm656 = vcmp.lt.s32.totalorder %v655, 6
    %v657 = vsel %vm656, 1, 0
    %vm658 = vcmp.eq.s32.totalorder %v657, 1
    %v659 = vsel %vm658, %v638, 0.0
    %v660 = vsel %vm658, %v639, 0.0
    %v661 = vsel %vm658, %v640, 0.0
    %v662 = vsel %vm658, %v641, 0.0
    %v663 = vsel %vm658, %v642, 0.0
    %v664 = vsel %vm658, %v643, 0.0
    %v665 = vsel %vm658, %v644, 0.0
    %v666 = vsel %vm658, %v645, 0.0
    %v667 = vsel %vm658, %v646, 0.0
    %v668 = vsel %vm658, %v647, 0.0
    %v669 = vsel %vm658, %v648, 0.0
    %v670 = vsel %vm658, %v649, 0.0
    %v671 = vsel %vm658, %v650, 0.0
    %v672 = vsel %vm658, %v651, 0.0
    %v673 = vsel %vm658, %v652, 0.0
    %v674 = vsel %vm658, %v653, 0.0
    %v675 = vrot.slane %v659, 4
    %v676 = vadd.f32 %v659, %v675
    %v677 = vrot.slane %v676, 2
    %v678 = vadd.f32 %v676, %v677
    %v679 = vrot.slane %v678, 1
    %v680 = vadd.f32 %v678, %v679
    %v681 = vrot.slane %v660, 4
    %v682 = vadd.f32 %v660, %v681
    %v683 = vrot.slane %v682, 2
    %v684 = vadd.f32 %v682, %v683
    %v685 = vrot.slane %v684, 1
    %v686 = vadd.f32 %v684, %v685
    %v687 = vrot.slane %v661, 4
    %v688 = vadd.f32 %v661, %v687
    %v689 = vrot.slane %v688, 2
    %v690 = vadd.f32 %v688, %v689
    %v691 = vrot.slane %v690, 1
    %v692 = vadd.f32 %v690, %v691
    %v693 = vrot.slane %v662, 4
    %v694 = vadd.f32 %v662, %v693
    %v695 = vrot.slane %v694, 2
    %v696 = vadd.f32 %v694, %v695
    %v697 = vrot.slane %v696, 1
    %v698 = vadd.f32 %v696, %v697
    %v699 = vrot.slane %v663, 4
    %v700 = vadd.f32 %v663, %v699
    %v701 = vrot.slane %v700, 2
    %v702 = vadd.f32 %v700, %v701
    %v703 = vrot.slane %v702, 1
    %v704 = vadd.f32 %v702, %v703
    %v705 = vrot.slane %v664, 4
    %v706 = vadd.f32 %v664, %v705
    %v707 = vrot.slane %v706, 2
    %v708 = vadd.f32 %v706, %v707
    %v709 = vrot.slane %v708, 1
    %v710 = vadd.f32 %v708, %v709
    %v711 = vrot.slane %v665, 4
    %v712 = vadd.f32 %v665, %v711
    %v713 = vrot.slane %v712, 2
    %v714 = vadd.f32 %v712, %v713
    %v715 = vrot.slane %v714, 1
    %v716 = vadd.f32 %v714, %v715
    %v717 = vrot.slane %v666, 4
    %v718 = vadd.f32 %v666, %v717
    %v719 = vrot.slane %v718, 2
    %v720 = vadd.f32 %v718, %v719
    %v721 = vrot.slane %v720, 1
    %v722 = vadd.f32 %v720, %v721
    %v723 = vrot.slane %v667, 4
    %v724 = vadd.f32 %v667, %v723
    %v725 = vrot.slane %v724, 2
    %v726 = vadd.f32 %v724, %v725
    %v727 = vrot.slane %v726, 1
    %v728 = vadd.f32 %v726, %v727
    %v729 = vrot.slane %v668, 4
    %v730 = vadd.f32 %v668, %v729
    %v731 = vrot.slane %v730, 2
    %v732 = vadd.f32 %v730, %v731
    %v733 = vrot.slane %v732, 1
    %v734 = vadd.f32 %v732, %v733
    %v735 = vrot.slane %v669, 4
    %v736 = vadd.f32 %v669, %v735
    %v737 = vrot.slane %v736, 2
    %v738 = vadd.f32 %v736, %v737
    %v739 = vrot.slane %v738, 1
    %v740 = vadd.f32 %v738, %v739
    %v741 = vrot.slane %v670, 4
    %v742 = vadd.f32 %v670, %v741
    %v743 = vrot.slane %v742, 2
    %v744 = vadd.f32 %v742, %v743
    %v745 = vrot.slane %v744, 1
    %v746 = vadd.f32 %v744, %v745
    %v747 = vrot.slane %v671, 4
    %v748 = vadd.f32 %v671, %v747
    %v749 = vrot.slane %v748, 2
    %v750 = vadd.f32 %v748, %v749
    %v751 = vrot.slane %v750, 1
    %v752 = vadd.f32 %v750, %v751
    %v753 = vrot.slane %v672, 4
    %v754 = vadd.f32 %v672, %v753
    %v755 = vrot.slane %v754, 2
    %v756 = vadd.f32 %v754, %v755
    %v757 = vrot.slane %v756, 1
    %v758 = vadd.f32 %v756, %v757
    %v759 = vrot.slane %v673, 4
    %v760 = vadd.f32 %v673, %v759
    %v761 = vrot.slane %v760, 2
    %v762 = vadd.f32 %v760, %v761
    %v763 = vrot.slane %v762, 1
    %v764 = vadd.f32 %v762, %v763
    %v765 = vrot.slane %v674, 4
    %v766 = vadd.f32 %v674, %v765
    %v767 = vrot.slane %v766, 2
    %v768 = vadd.f32 %v766, %v767
    %v769 = vrot.slane %v768, 1
    %v770 = vadd.f32 %v768, %v769
    %v771 = vmul.f32 %v680, 0.16666667
    %v772 = vmul.f32 %v686, 0.16666667
    %v773 = vmul.f32 %v692, 0.16666667
    %v774 = vmul.f32 %v698, 0.16666667
    %v775 = vmul.f32 %v704, 0.16666667
    %v776 = vmul.f32 %v710, 0.16666667
    %v777 = vmul.f32 %v716, 0.16666667
    %v778 = vmul.f32 %v722, 0.16666667
    %v779 = vmul.f32 %v728, 0.16666667
    %v780 = vmul.f32 %v734, 0.16666667
    %v781 = vmul.f32 %v740, 0.16666667
    %v782 = vmul.f32 %v746, 0.16666667
    %v783 = vmul.f32 %v752, 0.16666667
    %v784 = vmul.f32 %v758, 0.16666667
    %v785 = vmul.f32 %v764, 0.16666667
    %v786 = vmul.f32 %v770, 0.16666667
    %vm803 = vcmask 1041409
    %v804 = vsel %vm803, %v772, %v771
    %vm805 = vcmask 1042434
    %v806 = vsel %vm805, %v773, %v804
    %vm807 = vcmask 1043459
    %v808 = vsel %vm807, %v774, %v806
    %vm809 = vcmask 1044484
    %v810 = vsel %vm809, %v775, %v808
    %vm811 = vcmask 1045509
    %v812 = vsel %vm811, %v776, %v810
    %vm813 = vcmask 1046534
    %v814 = vsel %vm813, %v777, %v812
    %vm815 = vcmask 1047559
    %v816 = vsel %vm815, %v778, %v814
    %v817 = vsel %vm803, %v780, %v779
    %v818 = vsel %vm805, %v781, %v817
    %v819 = vsel %vm807, %v782, %v818
    %v820 = vsel %vm809, %v783, %v819
    %v821 = vsel %vm811, %v784, %v820
    %v822 = vsel %vm813, %v785, %v821
    %v823 = vsel %vm815, %v786, %v822
    %826 = vst [vmem:[#allocation7] sm:$0xff] %v816
    %827 = vst [vmem:[#allocation7 + $0x8] sm:$0xff] %v823
    %v828 = vld [vmem:[%s3] sm:$0xff]
    %v829 = vld [vmem:[%s3 + $0x8] sm:$0xff]
    %v830 = vld [vmem:[%s3 + $0x10] sm:$0xff]
    %v831 = vld [vmem:[%s3 + $0x18] sm:$0xff]
    %v832 = vld [vmem:[%s3 + $0x20] sm:$0xff]
    %v833 = vld [vmem:[%s3 + $0x28] sm:$0xff]
    %v834 = vld [vmem:[%s3 + $0x30] sm:$0xff]
    %v835 = vld [vmem:[%s3 + $0x38] sm:$0xff]
    %v836 = vld [vmem:[%s3 + $0x40] sm:$0xff]
    %v837 = vld [vmem:[%s3 + $0x48] sm:$0xff]
    %v838 = vld [vmem:[%s3 + $0x50] sm:$0xff]
    %v839 = vld [vmem:[%s3 + $0x58] sm:$0xff]
    %v840 = vld [vmem:[%s3 + $0x60] sm:$0xff]
    %v841 = vld [vmem:[%s3 + $0x68] sm:$0xff]
    %v842 = vld [vmem:[%s3 + $0x70] sm:$0xff]
    %v843 = vld [vmem:[%s3 + $0x78] sm:$0xff]
    %v844 = vld [vmem:[%s4] sm:$0x1]
    %v846 = vlaneseq
    %v847 = vshrl.u32 %v846, 7
    %v848 = vsub.s32 0, %v847
    %v849 = vrot.slane %v844, %v848
    %851 = vmatprep.subr.mxu0 0.0
    %852 = vmatpush1.msra.mxu0 %v828
    %853 = vmatprep.subr.mxu0 0.0
    %854 = vmatpush1.msra.mxu0 %v829
    %855 = vmatprep.subr.mxu0 0.0
    %856 = vmatpush1.msra.mxu0 %v830
    %857 = vmatprep.subr.mxu0 0.0
    %858 = vmatpush1.msra.mxu0 %v831
    %859 = vmatprep.subr.mxu0 0.0
    %860 = vmatpush1.msra.mxu0 %v832
    %861 = vmatprep.subr.mxu0 0.0
    %862 = vmatpush1.msra.mxu0 %v833
    %863 = vmatprep.subr.mxu0 0.0
    %864 = vmatpush1.msra.mxu0 %v834
    %865 = vmatprep.subr.mxu0 0.0
    %866 = vmatpush1.msra.mxu0 %v835
    %867 = vmatprep.subr.mxu0 0.0
    %868 = vmatpush1.msra.mxu0 %v836
    %869 = vmatprep.subr.mxu0 0.0
    %870 = vmatpush1.msra.mxu0 %v837
    %871 = vmatprep.subr.mxu0 0.0
    %872 = vmatpush1.msra.mxu0 %v838
    %873 = vmatprep.subr.mxu0 0.0
    %874 = vmatpush1.msra.mxu0 %v839
    %875 = vmatprep.subr.mxu0 0.0
    %876 = vmatpush1.msra.mxu0 %v840
    %877 = vmatprep.subr.mxu0 0.0
    %878 = vmatpush1.msra.mxu0 %v841
    %879 = vmatprep.subr.mxu0 0.0
    %880 = vmatpush1.msra.mxu0 %v842
    %881 = vmatprep.subr.mxu0 0.0
    %882 = vmatpush1.msra.mxu0 %v843
    %883 = vmatprep.subr.mxu0 0.0
    %884 = vmatpush1.msra.mxu0 0.0
    %885 = vmatprep.subr.mxu0 0.0
    %886 = vmatpush1.msra.mxu0 0.0
    %887 = vmatprep.subr.mxu0 0.0
    %888 = vmatpush1.msra.mxu0 0.0
    %889 = vmatprep.subr.mxu0 0.0
    %890 = vmatpush1.msra.mxu0 0.0
    %891 = vmatprep.subr.mxu0 0.0
    %892 = vmatpush1.msra.mxu0 0.0
    %893 = vmatprep.subr.mxu0 0.0
    %894 = vmatpush1.msra.mxu0 0.0
    %895 = vmatprep.subr.mxu0 0.0
    %896 = vmatpush1.msra.mxu0 0.0
    %897 = vmatprep.subr.mxu0 0.0
    %898 = vmatpush1.msra.mxu0 0.0
    %899 = vmatprep.subr.mxu0 0.0
    %900 = vmatpush1.msra.mxu0 0.0
    %901 = vmatprep.subr.mxu0 0.0
    %902 = vmatpush1.msra.mxu0 0.0
    %903 = vmatprep.subr.mxu0 0.0
    %904 = vmatpush1.msra.mxu0 0.0
    %905 = vmatprep.subr.mxu0 0.0
    %906 = vmatpush1.msra.mxu0 0.0
    %907 = vmatprep.subr.mxu0 0.0
    %908 = vmatpush1.msra.mxu0 0.0
    %909 = vmatprep.subr.mxu0 0.0
    %910 = vmatpush1.msra.mxu0 0.0
    %911 = vmatprep.subr.mxu0 0.0
    %912 = vmatpush1.msra.mxu0 0.0
    %913 = vmatprep.subr.mxu0 0.0
    %914 = vmatpush1.msra.mxu0 0.0
    %915 = vmatprep.mubr.f32.mxu0 0.0
    %916 = vmatmul.mubr.f32.gmra.mrb[0].mxu0 %v816
    %v917 = vpop.f32.mrb[0].mxu0
    %v918 = vadd.f32 %v849, %v917
    %v919 = vpop.f32.mrb[0].mxu0
    %920 = vmatprep.mubr.f32.mxu0 0.0
    %921 = vmatmul.mubr.f32.gmra.mrb[0].mxu0 %v823
    %v922 = vpop.f32.mrb[0].mxu0
    %v923 = vadd.f32 %v849, %v922
    %v924 = vpop.f32.mrb[0].mxu0
    %925 = vdwg.mxu0
    %v926 = vmax.f32 %v918, 0.0
    %v927 = vmax.f32 %v923, 0.0
    %v928 = vld [vmem:[#allocation5] sm:$0xff]
    %v929 = vld [vmem:[#allocation5 + $0x8] sm:$0xff]
    %v930 = vld [vmem:[#allocation5 + $0x10] sm:$0xff]
    %v931 = vld [vmem:[#allocation5 + $0x18] sm:$0xff]
    %v932 = vld [vmem:[#allocation5 + $0x20] sm:$0xff]
    %v933 = vld [vmem:[#allocation5 + $0x28] sm:$0xff]
    %v934 = vld [vmem:[#allocation5 + $0x30] sm:$0xff]
    %v935 = vld [vmem:[#allocation5 + $0x38] sm:$0xff]
    %v936 = vld [vmem:[#allocation5 + $0x40] sm:$0xff]
    %v937 = vld [vmem:[#allocation5 + $0x48] sm:$0xff]
    %v938 = vld [vmem:[#allocation5 + $0x50] sm:$0xff]
    %v939 = vld [vmem:[#allocation5 + $0x58] sm:$0xff]
    %v940 = vld [vmem:[#allocation5 + $0x60] sm:$0xff]
    %v941 = vld [vmem:[#allocation5 + $0x68] sm:$0xff]
    %v942 = vld [vmem:[#allocation5 + $0x70] sm:$0xff]
    %v943 = vld [vmem:[#allocation5 + $0x78] sm:$0xff]
    %v944 = vld [vmem:[%s6] sm:$0x1]
    %v946 = vlaneseq
    %v947 = vshrl.u32 %v946, 7
    %v948 = vsub.s32 0, %v947
    %v949 = vrot.slane %v944, %v948
    %951 = vmatprep.subr.mxu0 0.0
    %952 = vmatpush1.msra.mxu0 %v928
    %953 = vmatprep.subr.mxu0 0.0
    %954 = vmatpush1.msra.mxu0 %v929
    %955 = vmatprep.subr.mxu0 0.0
    %956 = vmatpush1.msra.mxu0 %v930
    %957 = vmatprep.subr.mxu0 0.0
    %958 = vmatpush1.msra.mxu0 %v931
    %959 = vmatprep.subr.mxu0 0.0
    %960 = vmatpush1.msra.mxu0 %v932
    %961 = vmatprep.subr.mxu0 0.0
    %962 = vmatpush1.msra.mxu0 %v933
    %963 = vmatprep.subr.mxu0 0.0
    %964 = vmatpush1.msra.mxu0 %v934
    %965 = vmatprep.subr.mxu0 0.0
    %966 = vmatpush1.msra.mxu0 %v935
    %967 = vmatprep.subr.mxu0 0.0
    %968 = vmatpush1.msra.mxu0 %v936
    %969 = vmatprep.subr.mxu0 0.0
    %970 = vmatpush1.msra.mxu0 %v937
    %971 = vmatprep.subr.mxu0 0.0
    %972 = vmatpush1.msra.mxu0 %v938
    %973 = vmatprep.subr.mxu0 0.0
    %974 = vmatpush1.msra.mxu0 %v939
    %975 = vmatprep.subr.mxu0 0.0
    %976 = vmatpush1.msra.mxu0 %v940
    %977 = vmatprep.subr.mxu0 0.0
    %978 = vmatpush1.msra.mxu0 %v941
    %979 = vmatprep.subr.mxu0 0.0
    %980 = vmatpush1.msra.mxu0 %v942
    %981 = vmatprep.subr.mxu0 0.0
    %982 = vmatpush1.msra.mxu0 %v943
    %983 = vmatprep.subr.mxu0 0.0
    %984 = vmatpush1.msra.mxu0 0.0
    %985 = vmatprep.subr.mxu0 0.0
    %986 = vmatpush1.msra.mxu0 0.0
    %987 = vmatprep.subr.mxu0 0.0
    %988 = vmatpush1.msra.mxu0 0.0
    %989 = vmatprep.subr.mxu0 0.0
    %990 = vmatpush1.msra.mxu0 0.0
    %991 = vmatprep.subr.mxu0 0.0
    %992 = vmatpush1.msra.mxu0 0.0
    %993 = vmatprep.subr.mxu0 0.0
    %994 = vmatpush1.msra.mxu0 0.0
    %995 = vmatprep.subr.mxu0 0.0
    %996 = vmatpush1.msra.mxu0 0.0
    %997 = vmatprep.subr.mxu0 0.0
    %998 = vmatpush1.msra.mxu0 0.0
    %999 = vmatprep.subr.mxu0 0.0
    %1000 = vmatpush1.msra.mxu0 0.0
    %1001 = vmatprep.subr.mxu0 0.0
    %1002 = vmatpush1.msra.mxu0 0.0
    %1003 = vmatprep.subr.mxu0 0.0
    %1004 = vmatpush1.msra.mxu0 0.0
    %1005 = vmatprep.subr.mxu0 0.0
    %1006 = vmatpush1.msra.mxu0 0.0
    %1007 = vmatprep.subr.mxu0 0.0
    %1008 = vmatpush1.msra.mxu0 0.0
    %1009 = vmatprep.subr.mxu0 0.0
    %1010 = vmatpush1.msra.mxu0 0.0
    %1011 = vmatprep.subr.mxu0 0.0
    %1012 = vmatpush1.msra.mxu0 0.0
    %1013 = vmatprep.subr.mxu0 0.0
    %1014 = vmatpush1.msra.mxu0 0.0
    %1015 = vmatprep.mubr.f32.mxu0 0.0
    %1016 = vmatmul.mubr.f32.gmra.mrb[0].mxu0 %v926
    %v1017 = vpop.f32.mrb[0].mxu0
    %v1018 = vadd.f32 %v949, %v1017
    %v1019 = vpop.f32.mrb[0].mxu0
    %1020 = vmatprep.mubr.f32.mxu0 0.0
    %1021 = vmatmul.mubr.f32.gmra.mrb[0].mxu0 %v927
    %v1022 = vpop.f32.mrb[0].mxu0
    %v1023 = vadd.f32 %v949, %v1022
    %v1024 = vpop.f32.mrb[0].mxu0
    %1025 = vdwg.mxu0
    %1026 = vmax.xlane.f32.xlu0 %v1018
    %v1027 = vpop.xlane.xlu0 %1026
    %1028 = vmax.xlane.f32.xlu0 %v1023
    %v1029 = vpop.xlane.xlu0 %1028
    %v1030 = vsub.f32 %v1018, %v1027
    %v1031 = vsub.f32 %v1023, %v1029
    %v1032 = vmul.f32 %v1030, 1.442695
    %v1033 = vpow.pop %v1032
    %v1034 = vmul.f32 %v1031, 1.442695
    %v1035 = vpow.pop %v1034
    %1036 = vadd.xlane.f32.xlu0 %v1033
    %v1037 = vpop.xlane.xlu0 %1036
    %1038 = vadd.xlane.f32.xlu0 %v1035
    %v1039 = vpop.xlane.xlu0 %1038
    %v1040 = vlog2.pop %v1037
    %v1041 = vmul.f32 %v1040, 0.6931472
    %v1042 = vlog2.pop %v1039
    %v1043 = vmul.f32 %v1042, 0.6931472
    %v1044 = vsub.f32 %v1030, %v1041
    %v1045 = vsub.f32 %v1031, %v1043
    %1046 = vst [vmem:[#allocation8] sm:$0xff] %v1044
    %1047 = vst [vmem:[#allocation8 + $0x8] sm:$0xff] %v1045
    // Predicated region
    $region38: #{tpu_custom_call.1} parent=1 // pred_check
      _
    $region39: #{tpu_custom_call.1} parent=1 // pred_check_branch
      %1049 = sbr.rel (0) target = $region41
    $region40: #{tpu_custom_call.1} parent=1 // pred_region
      %s1051 = ssub.s32 256, 256
      %1052 = vsyncadd [#allocation4], %s1051
      %s1053 = sshll.u32 [#allocation7], 4
      %s1054 = int_to_ptr.vmem [resolvable:$true] %s1053
      %1059 = dma.vmem_to_hbm [thread:$0]  %s1054, 256, %s7, [#allocation4], 128, 128, 8
    $region41: #{tpu_custom_call.1} parent=1 // pred_fallthru
      _
    // Predicated region
    $region42: #{tpu_custom_call.1} parent=1 // pred_check
      _
    $region43: #{tpu_custom_call.1} parent=1 // pred_check_branch
      %1061 = sbr.rel (0) target = $region45
    $region44: #{tpu_custom_call.1} parent=1 // pred_region
      %s1063 = ssub.s32 256, 256
      %1064 = vsyncadd [#allocation9], %s1063
      %s1065 = sshll.u32 [#allocation8], 4
      %s1066 = int_to_ptr.vmem [resolvable:$true] %s1065
      %1071 = dma.vmem_to_hbm [thread:$0]  %s1066, 256, %s8, [#allocation9], 128, 128, 8
    $region45: #{tpu_custom_call.1} parent=1 // pred_fallthru
      _
    // Predicated region
    $region46: #{tpu_custom_call.1} parent=1 // pred_check
      _
    $region47: #{tpu_custom_call.1} parent=1 // pred_check_branch
      %1073 = sbr.rel (0) target = $region49
    $region48: #{tpu_custom_call.1} parent=1 // pred_region
      %1074 = dma.done [#allocation4], 256
    $region49: #{tpu_custom_call.1} parent=1 // pred_fallthru
      _
    // Predicated region
    $region50: #{tpu_custom_call.1} parent=1 // pred_check
      _
    $region51: #{tpu_custom_call.1} parent=1 // pred_check_branch
      %1076 = sbr.rel (0) target = $region53
    $region52: #{tpu_custom_call.1} parent=1 // pred_region
      %1077 = dma.done [#allocation9], 256
    $region53: #{tpu_custom_call.1} parent=1 // pred_fallthru
      _
    %1078 = vsyncpa [#allocation3], 1
    %1079 = vsyncpa [#allocation6], 1
    %1080 = vsyncpa [#allocation4], 1
    %1081 = vsyncpa [#allocation9], 1

</llo_original>
